<compile_context>
chip_gen: v7x
topology: tpu7x:2x2x1
jax: 0.10.0
libtpu: 0.0.40
codegen_flags: <defaults>
</compile_context>

<pallas_src>
import math

import jax
import jax.numpy as jnp
from jax import lax
from jax.experimental import pallas as pl
from jax.experimental.pallas import tpu as pltpu


_TC = 8  # timestep chunk: one full (8, 128) sublane tile per output store


def hedge_kernel(*refs):
    """Full recurrence for one batch tile, batch on the lane dimension.

    refs = (s_ref_0, ..., s_ref_{input_dim-1}, wb_ref, b2_ref, out_ref)
      s_ref_i: (steps, bt)              VMEM  lane-dense plane of S feature i
      wb_ref:  (hidden, input_dim + 3)  VMEM  cols = [W1_s cols, W1_delta, W2, b1]
      b2_ref:  (1, 1)                   SMEM  scalar output bias
      out_ref: (steps, bt)              VMEM  deltas, time-major / batch on lanes
    """
    *s_refs, wb_ref, b2_ref, out_ref = refs
    input_dim = len(s_refs)
    steps, bt = out_ref.shape
    hidden = wb_ref.shape[0]

    wb = wb_ref[...].astype(jnp.float32)  # (hidden, input_dim + 3)

    # Loop-invariant (hidden, bt) broadcast tiles, hoisted ONCE above the time
    # loop (JAX does not CSE broadcast_in_dim inside the fori_loop body).
    w1s_t = [jnp.broadcast_to(wb[:, i:i + 1], (hidden, bt)) for i in range(input_dim)]
    w1d_t = jnp.broadcast_to(wb[:, input_dim:input_dim + 1], (hidden, bt))
    w2_t = jnp.broadcast_to(wb[:, input_dim + 1:input_dim + 2], (hidden, bt))
    b1_t = jnp.broadcast_to(wb[:, input_dim + 2:input_dim + 3], (hidden, bt))
    b2 = b2_ref[0, 0]  # scalar from SMEM

    def run_steps(n, delta, s_chunks):
        """`n` statically-unrolled timesteps.

        s_chunks[i]: (n, bt) value holding plane i rows for these timesteps.
        Returns (rows (n, bt), new delta (1, bt)).
        """
        rows = []
        for k in range(n):
            # Input projection for this step (independent of the carry, so the
            # scheduler overlaps it with the serial chain):
            z = b1_t
            for i in range(input_dim):
                z = z + s_chunks[i][k:k + 1, :] * w1s_t[i]   # (1,bt)*(hidden,bt)
            pre = z + delta * w1d_t                          # carry enters here
            a = jnp.maximum(pre, 0.0)                        # ReLU (hidden, bt)
            # hidden-reduction: a few vreg adds + one 8-wide sublane reduce
            d = jnp.sum(a * w2_t, axis=0, keepdims=True) + b2   # (1, bt)
            rows.append(d)
            delta = d
        return jnp.concatenate(rows, axis=0), delta          # (n, bt), (1, bt)

    num_chunks = steps // _TC
    rem = steps - num_chunks * _TC

    delta = jnp.zeros((1, bt), jnp.float32)

    if num_chunks > 0:
        def chunk_body(c, delta):
            base = pl.multiple_of(c * _TC, _TC)
            # One aligned vld per plane for the whole chunk.
            s_chunks = [s_refs[i][pl.ds(base, _TC), :].astype(jnp.float32)
                        for i in range(input_dim)]
            rows, delta = run_steps(_TC, delta, s_chunks)
            # Single aligned, lane-dense (8, bt) slab store per chunk.
            out_ref[pl.ds(base, _TC), :] = rows.astype(out_ref.dtype)
            return delta

        delta = lax.fori_loop(0, num_chunks, chunk_body, delta)

    if rem > 0:  # static tail when steps % 8 != 0
        base = num_chunks * _TC
        s_chunks = [s_refs[i][base:base + rem, :].astype(jnp.float32)
                    for i in range(input_dim)]
        rows, delta = run_steps(rem, delta, s_chunks)
        out_ref[base:base + rem, :] = rows.astype(out_ref.dtype)
    # HBM writeback of the lane-dense (steps, bt) block happens once, at the
    # pipeline epilogue for this grid step.


def _pick_batch_tile(batch):
    """Lane-full tiles only (multiple of 128) or the whole batch.

    128-wide tiles keep every block lane-dense and, when batch >= 256, give the
    grid >= 2 iterations so v7x's two TensorCores both get work.
    """
    if batch % 128 == 0:
        return 128
    # TODO(synk): add a masked ragged-tile path instead of one full-batch tile
    # for large batches that are not a multiple of 128.
    return batch


def recurrent_hedge_forward(S, w1, b1, w2, b2):
    """S: (batch, steps, input_dim) in the PyTorch layout. Returns (batch, steps)."""
    batch, steps, input_dim = S.shape
    hidden = w2.shape[0]

    # ---- layout glue (plain XLA, per perf review) ----
    # Lane-dense S planes: one (steps, batch) plane per input feature.
    planes = [jnp.transpose(S[:, :, i]).astype(jnp.float32) for i in range(input_dim)]
    # Pack every (hidden,) weight column the recurrence needs into one tile:
    # [W1 rows for S features (transposed), W1 row for delta_prev, W2, b1].
    # Rows w1[input_dim + 1:] multiply h_t, which is identically zero in the
    # reference module -> dropped exactly (dead compute / dead DMA).
    wb = jnp.concatenate(
        [jnp.transpose(w1[:input_dim]),          # (hidden, input_dim)
         w1[input_dim].reshape(hidden, 1),       # (hidden, 1)  delta_prev row
         w2.reshape(hidden, 1),                  # (hidden, 1)
         b1.reshape(hidden, 1)],                 # (hidden, 1)
        axis=1).astype(jnp.float32)
    b2s = b2.reshape(1, 1).astype(jnp.float32)

    bt = _pick_batch_tile(batch)
    grid = (batch // bt,)

    out_tb = pl.pallas_call(
        hedge_kernel,
        out_shape=jax.ShapeDtypeStruct((steps, batch), jnp.float32),
        grid_spec=pltpu.PrefetchScalarGridSpec(
            num_scalar_prefetch=0,
            grid=grid,
            in_specs=(
                [pl.BlockSpec((steps, bt), lambda i: (0, i))          # S planes
                 for _ in range(input_dim)]
                + [pl.BlockSpec((hidden, input_dim + 3), lambda i: (0, 0)),  # weights
                   pl.BlockSpec(memory_space=pltpu.MemorySpace.SMEM)]        # b2 scalar
            ),
            out_specs=pl.BlockSpec((steps, bt), lambda i: (0, i)),
        ),
        compiler_params=pltpu.CompilerParams(
            # Batch tiles are independent -> parallel (splits across TCs on v7x).
            # The time recurrence is entirely inside the kernel body.
            dimension_semantics=("parallel",),
            vmem_limit_bytes=32 * 1024 * 1024),
    )(*planes, wb, b2s)

    return jnp.transpose(out_tb)                 # (batch, steps)


def reference_forward(S, w1, b1, w2, b2):
    """Pure-JAX mirror of the PyTorch module (for verification)."""
    batch, steps, _ = S.shape
    hidden = w2.shape[0]
    delta_prev = jnp.zeros((batch, 1), jnp.float32)
    h_t = jnp.zeros((batch, hidden), jnp.float32)
    outs = []
    for t in range(steps):
        x = jnp.concatenate([S[:, t, :], delta_prev, h_t], axis=1)
        z = jnp.maximum(x @ w1 + b1, 0.0)
        d = z @ w2 + b2
        outs.append(d)
        delta_prev = d
    return jnp.concatenate(outs, axis=1)          # (batch, steps)


if __name__ == "__main__":
    batch, steps, input_dim, hidden = 2, 8, 2, 32
    in_total = input_dim + 1 + hidden             # 35

    key = jax.random.PRNGKey(0)
    k_w1, k_b1, k_w2, k_b2, k_s = jax.random.split(key, 5)

    # Deterministic init mimicking nn.Linear's uniform(-1/sqrt(fan_in), +1/sqrt(fan_in)).
    bound1 = 1.0 / math.sqrt(in_total)
    bound2 = 1.0 / math.sqrt(hidden)
    w1 = jax.random.uniform(k_w1, (in_total, hidden), jnp.float32, -bound1, bound1)
    b1 = jax.random.uniform(k_b1, (hidden,), jnp.float32, -bound1, bound1)
    w2 = jax.random.uniform(k_w2, (hidden, 1), jnp.float32, -bound2, bound2)
    b2 = jax.random.uniform(k_b2, (1,), jnp.float32, -bound2, bound2)

    S = jax.random.normal(k_s, (batch, steps, input_dim), jnp.float32)

    out = recurrent_hedge_forward(S, w1, b1, w2, b2)
    out = jax.block_until_ready(out)

    ref = reference_forward(S, w1, b1, w2, b2)
    assert out.shape == (batch, steps), out.shape
    assert jnp.allclose(out, ref, atol=1e-5, rtol=1e-5), (out, ref)

    print("KERNEL_OK")
</pallas_src>

<mosaic_0001>
module attributes {stable_mosaic.version = 11 : i64} {
  func.func @hedge_kernel(%arg0: i32, %arg1: memref<8x2xf32, #tpu.memory_space<vmem>>, %arg2: memref<8x2xf32, #tpu.memory_space<vmem>>, %arg3: memref<32x5xf32, #tpu.memory_space<vmem>>, %arg4: memref<1x1xf32, #tpu.memory_space<smem>>, %arg5: memref<8x2xf32, #tpu.memory_space<vmem>>) attributes {dimension_semantics = [#tpu.dimension_semantics<parallel>], iteration_bounds = array<i64: 1>, scalar_prefetch = 0 : i64, scratch_operands = 0 : i64, tpu.core_type = #tpu.core_type<tc>, window_params = [{transform_indices = @transform_0, window_bounds = array<i64: 8, 2>}, {transform_indices = @transform_1, window_bounds = array<i64: 8, 2>}, {pipeline_mode = #tpu.pipeline_mode<synchronous>, transform_indices = @transform_2, window_bounds = array<i64: 32, 5>}, {transform_indices = @transform_3, window_bounds = array<i64: 1, 1>}, {transform_indices = @transform_4, window_bounds = array<i64: 8, 2>}]} {
    %c0 = arith.constant 0 : index
    %c0_0 = arith.constant 0 : index
    %0 = vector.load %arg3[%c0, %c0_0] : memref<32x5xf32, #tpu.memory_space<vmem>>, vector<32x5xf32>
    %1 = vector.extract_strided_slice %0 {offsets = [0, 0], sizes = [32, 1], strides = [1, 1]} : vector<32x5xf32> to vector<32x1xf32>
    %2 = vector.shape_cast %1 : vector<32x1xf32> to vector<32x1xf32>
    %3 = vector.broadcast %2 : vector<32x1xf32> to vector<32x2xf32>
    %4 = vector.extract_strided_slice %0 {offsets = [0, 1], sizes = [32, 1], strides = [1, 1]} : vector<32x5xf32> to vector<32x1xf32>
    %5 = vector.shape_cast %4 : vector<32x1xf32> to vector<32x1xf32>
    %6 = vector.broadcast %5 : vector<32x1xf32> to vector<32x2xf32>
    %7 = vector.extract_strided_slice %0 {offsets = [0, 2], sizes = [32, 1], strides = [1, 1]} : vector<32x5xf32> to vector<32x1xf32>
    %8 = vector.shape_cast %7 : vector<32x1xf32> to vector<32x1xf32>
    %9 = vector.broadcast %8 : vector<32x1xf32> to vector<32x2xf32>
    %10 = vector.extract_strided_slice %0 {offsets = [0, 3], sizes = [32, 1], strides = [1, 1]} : vector<32x5xf32> to vector<32x1xf32>
    %11 = vector.shape_cast %10 : vector<32x1xf32> to vector<32x1xf32>
    %12 = vector.broadcast %11 : vector<32x1xf32> to vector<32x2xf32>
    %13 = vector.extract_strided_slice %0 {offsets = [0, 4], sizes = [32, 1], strides = [1, 1]} : vector<32x5xf32> to vector<32x1xf32>
    %14 = vector.shape_cast %13 : vector<32x1xf32> to vector<32x1xf32>
    %15 = vector.broadcast %14 : vector<32x1xf32> to vector<32x2xf32>
    %c0_1 = arith.constant 0 : index
    %c0_2 = arith.constant 0 : index
    %16 = memref.load %arg4[%c0_1, %c0_2] : memref<1x1xf32, #tpu.memory_space<smem>>
    %cst = arith.constant 0.000000e+00 : f32
    %17 = vector.broadcast %cst : f32 to vector<1x2xf32>
    %c0_i32 = arith.constant 0 : i32
    %c8_i32 = arith.constant 8 : i32
    %18 = arith.muli %c0_i32, %c8_i32 : i32
    %19 = tpu.assume_multiple %18, 8 : i32
    %20 = arith.index_cast %19 : i32 to index
    %c0_3 = arith.constant 0 : index
    %21 = vector.load %arg1[%20, %c0_3] : memref<8x2xf32, #tpu.memory_space<vmem>>, vector<8x2xf32>
    %22 = arith.index_cast %19 : i32 to index
    %c0_4 = arith.constant 0 : index
    %23 = vector.load %arg2[%22, %c0_4] : memref<8x2xf32, #tpu.memory_space<vmem>>, vector<8x2xf32>
    %24 = vector.extract_strided_slice %21 {offsets = [0, 0], sizes = [1, 2], strides = [1, 1]} : vector<8x2xf32> to vector<1x2xf32>
    %25 = vector.broadcast %24 : vector<1x2xf32> to vector<32x2xf32>
    %26 = arith.mulf %25, %3 : vector<32x2xf32>
    %27 = arith.addf %15, %26 : vector<32x2xf32>
    %28 = vector.extract_strided_slice %23 {offsets = [0, 0], sizes = [1, 2], strides = [1, 1]} : vector<8x2xf32> to vector<1x2xf32>
    %29 = vector.broadcast %28 : vector<1x2xf32> to vector<32x2xf32>
    %30 = arith.mulf %29, %6 : vector<32x2xf32>
    %31 = arith.addf %27, %30 : vector<32x2xf32>
    %32 = vector.broadcast %17 : vector<1x2xf32> to vector<32x2xf32>
    %33 = arith.mulf %32, %9 : vector<32x2xf32>
    %34 = arith.addf %31, %33 : vector<32x2xf32>
    %cst_5 = arith.constant 0.000000e+00 : f32
    %35 = vector.broadcast %cst_5 : f32 to vector<32x2xf32>
    %36 = arith.maximumf %34, %35 : vector<32x2xf32>
    %37 = arith.mulf %36, %12 : vector<32x2xf32>
    %cst_6 = arith.constant dense<0.000000e+00> : vector<2xf32>
    %38 = vector.multi_reduction <add>, %37, %cst_6 [0] : vector<32x2xf32> to vector<2xf32>
    %39 = vector.shape_cast %38 : vector<2xf32> to vector<1x2xf32>
    %40 = vector.broadcast %16 : f32 to vector<1x2xf32>
    %41 = arith.addf %39, %40 : vector<1x2xf32>
    %42 = vector.extract_strided_slice %21 {offsets = [1, 0], sizes = [1, 2], strides = [1, 1]} : vector<8x2xf32> to vector<1x2xf32>
    %43 = vector.broadcast %42 : vector<1x2xf32> to vector<32x2xf32>
    %44 = arith.mulf %43, %3 : vector<32x2xf32>
    %45 = arith.addf %15, %44 : vector<32x2xf32>
    %46 = vector.extract_strided_slice %23 {offsets = [1, 0], sizes = [1, 2], strides = [1, 1]} : vector<8x2xf32> to vector<1x2xf32>
    %47 = vector.broadcast %46 : vector<1x2xf32> to vector<32x2xf32>
    %48 = arith.mulf %47, %6 : vector<32x2xf32>
    %49 = arith.addf %45, %48 : vector<32x2xf32>
    %50 = vector.broadcast %41 : vector<1x2xf32> to vector<32x2xf32>
    %51 = arith.mulf %50, %9 : vector<32x2xf32>
    %52 = arith.addf %49, %51 : vector<32x2xf32>
    %cst_7 = arith.constant 0.000000e+00 : f32
    %53 = vector.broadcast %cst_7 : f32 to vector<32x2xf32>
    %54 = arith.maximumf %52, %53 : vector<32x2xf32>
    %55 = arith.mulf %54, %12 : vector<32x2xf32>
    %cst_8 = arith.constant dense<0.000000e+00> : vector<2xf32>
    %56 = vector.multi_reduction <add>, %55, %cst_8 [0] : vector<32x2xf32> to vector<2xf32>
    %57 = vector.shape_cast %56 : vector<2xf32> to vector<1x2xf32>
    %58 = vector.broadcast %16 : f32 to vector<1x2xf32>
    %59 = arith.addf %57, %58 : vector<1x2xf32>
    %60 = vector.extract_strided_slice %21 {offsets = [2, 0], sizes = [1, 2], strides = [1, 1]} : vector<8x2xf32> to vector<1x2xf32>
    %61 = vector.broadcast %60 : vector<1x2xf32> to vector<32x2xf32>
    %62 = arith.mulf %61, %3 : vector<32x2xf32>
    %63 = arith.addf %15, %62 : vector<32x2xf32>
    %64 = vector.extract_strided_slice %23 {offsets = [2, 0], sizes = [1, 2], strides = [1, 1]} : vector<8x2xf32> to vector<1x2xf32>
    %65 = vector.broadcast %64 : vector<1x2xf32> to vector<32x2xf32>
    %66 = arith.mulf %65, %6 : vector<32x2xf32>
    %67 = arith.addf %63, %66 : vector<32x2xf32>
    %68 = vector.broadcast %59 : vector<1x2xf32> to vector<32x2xf32>
    %69 = arith.mulf %68, %9 : vector<32x2xf32>
    %70 = arith.addf %67, %69 : vector<32x2xf32>
    %cst_9 = arith.constant 0.000000e+00 : f32
    %71 = vector.broadcast %cst_9 : f32 to vector<32x2xf32>
    %72 = arith.maximumf %70, %71 : vector<32x2xf32>
    %73 = arith.mulf %72, %12 : vector<32x2xf32>
    %cst_10 = arith.constant dense<0.000000e+00> : vector<2xf32>
    %74 = vector.multi_reduction <add>, %73, %cst_10 [0] : vector<32x2xf32> to vector<2xf32>
    %75 = vector.shape_cast %74 : vector<2xf32> to vector<1x2xf32>
    %76 = vector.broadcast %16 : f32 to vector<1x2xf32>
    %77 = arith.addf %75, %76 : vector<1x2xf32>
    %78 = vector.extract_strided_slice %21 {offsets = [3, 0], sizes = [1, 2], strides = [1, 1]} : vector<8x2xf32> to vector<1x2xf32>
    %79 = vector.broadcast %78 : vector<1x2xf32> to vector<32x2xf32>
    %80 = arith.mulf %79, %3 : vector<32x2xf32>
    %81 = arith.addf %15, %80 : vector<32x2xf32>
    %82 = vector.extract_strided_slice %23 {offsets = [3, 0], sizes = [1, 2], strides = [1, 1]} : vector<8x2xf32> to vector<1x2xf32>
    %83 = vector.broadcast %82 : vector<1x2xf32> to vector<32x2xf32>
    %84 = arith.mulf %83, %6 : vector<32x2xf32>
    %85 = arith.addf %81, %84 : vector<32x2xf32>
    %86 = vector.broadcast %77 : vector<1x2xf32> to vector<32x2xf32>
    %87 = arith.mulf %86, %9 : vector<32x2xf32>
    %88 = arith.addf %85, %87 : vector<32x2xf32>
    %cst_11 = arith.constant 0.000000e+00 : f32
    %89 = vector.broadcast %cst_11 : f32 to vector<32x2xf32>
    %90 = arith.maximumf %88, %89 : vector<32x2xf32>
    %91 = arith.mulf %90, %12 : vector<32x2xf32>
    %cst_12 = arith.constant dense<0.000000e+00> : vector<2xf32>
    %92 = vector.multi_reduction <add>, %91, %cst_12 [0] : vector<32x2xf32> to vector<2xf32>
    %93 = vector.shape_cast %92 : vector<2xf32> to vector<1x2xf32>
    %94 = vector.broadcast %16 : f32 to vector<1x2xf32>
    %95 = arith.addf %93, %94 : vector<1x2xf32>
    %96 = vector.extract_strided_slice %21 {offsets = [4, 0], sizes = [1, 2], strides = [1, 1]} : vector<8x2xf32> to vector<1x2xf32>
    %97 = vector.broadcast %96 : vector<1x2xf32> to vector<32x2xf32>
    %98 = arith.mulf %97, %3 : vector<32x2xf32>
    %99 = arith.addf %15, %98 : vector<32x2xf32>
    %100 = vector.extract_strided_slice %23 {offsets = [4, 0], sizes = [1, 2], strides = [1, 1]} : vector<8x2xf32> to vector<1x2xf32>
    %101 = vector.broadcast %100 : vector<1x2xf32> to vector<32x2xf32>
    %102 = arith.mulf %101, %6 : vector<32x2xf32>
    %103 = arith.addf %99, %102 : vector<32x2xf32>
    %104 = vector.broadcast %95 : vector<1x2xf32> to vector<32x2xf32>
    %105 = arith.mulf %104, %9 : vector<32x2xf32>
    %106 = arith.addf %103, %105 : vector<32x2xf32>
    %cst_13 = arith.constant 0.000000e+00 : f32
    %107 = vector.broadcast %cst_13 : f32 to vector<32x2xf32>
    %108 = arith.maximumf %106, %107 : vector<32x2xf32>
    %109 = arith.mulf %108, %12 : vector<32x2xf32>
    %cst_14 = arith.constant dense<0.000000e+00> : vector<2xf32>
    %110 = vector.multi_reduction <add>, %109, %cst_14 [0] : vector<32x2xf32> to vector<2xf32>
    %111 = vector.shape_cast %110 : vector<2xf32> to vector<1x2xf32>
    %112 = vector.broadcast %16 : f32 to vector<1x2xf32>
    %113 = arith.addf %111, %112 : vector<1x2xf32>
    %114 = vector.extract_strided_slice %21 {offsets = [5, 0], sizes = [1, 2], strides = [1, 1]} : vector<8x2xf32> to vector<1x2xf32>
    %115 = vector.broadcast %114 : vector<1x2xf32> to vector<32x2xf32>
    %116 = arith.mulf %115, %3 : vector<32x2xf32>
    %117 = arith.addf %15, %116 : vector<32x2xf32>
    %118 = vector.extract_strided_slice %23 {offsets = [5, 0], sizes = [1, 2], strides = [1, 1]} : vector<8x2xf32> to vector<1x2xf32>
    %119 = vector.broadcast %118 : vector<1x2xf32> to vector<32x2xf32>
    %120 = arith.mulf %119, %6 : vector<32x2xf32>
    %121 = arith.addf %117, %120 : vector<32x2xf32>
    %122 = vector.broadcast %113 : vector<1x2xf32> to vector<32x2xf32>
    %123 = arith.mulf %122, %9 : vector<32x2xf32>
    %124 = arith.addf %121, %123 : vector<32x2xf32>
    %cst_15 = arith.constant 0.000000e+00 : f32
    %125 = vector.broadcast %cst_15 : f32 to vector<32x2xf32>
    %126 = arith.maximumf %124, %125 : vector<32x2xf32>
    %127 = arith.mulf %126, %12 : vector<32x2xf32>
    %cst_16 = arith.constant dense<0.000000e+00> : vector<2xf32>
    %128 = vector.multi_reduction <add>, %127, %cst_16 [0] : vector<32x2xf32> to vector<2xf32>
    %129 = vector.shape_cast %128 : vector<2xf32> to vector<1x2xf32>
    %130 = vector.broadcast %16 : f32 to vector<1x2xf32>
    %131 = arith.addf %129, %130 : vector<1x2xf32>
    %132 = vector.extract_strided_slice %21 {offsets = [6, 0], sizes = [1, 2], strides = [1, 1]} : vector<8x2xf32> to vector<1x2xf32>
    %133 = vector.broadcast %132 : vector<1x2xf32> to vector<32x2xf32>
    %134 = arith.mulf %133, %3 : vector<32x2xf32>
    %135 = arith.addf %15, %134 : vector<32x2xf32>
    %136 = vector.extract_strided_slice %23 {offsets = [6, 0], sizes = [1, 2], strides = [1, 1]} : vector<8x2xf32> to vector<1x2xf32>
    %137 = vector.broadcast %136 : vector<1x2xf32> to vector<32x2xf32>
    %138 = arith.mulf %137, %6 : vector<32x2xf32>
    %139 = arith.addf %135, %138 : vector<32x2xf32>
    %140 = vector.broadcast %131 : vector<1x2xf32> to vector<32x2xf32>
    %141 = arith.mulf %140, %9 : vector<32x2xf32>
    %142 = arith.addf %139, %141 : vector<32x2xf32>
    %cst_17 = arith.constant 0.000000e+00 : f32
    %143 = vector.broadcast %cst_17 : f32 to vector<32x2xf32>
    %144 = arith.maximumf %142, %143 : vector<32x2xf32>
    %145 = arith.mulf %144, %12 : vector<32x2xf32>
    %cst_18 = arith.constant dense<0.000000e+00> : vector<2xf32>
    %146 = vector.multi_reduction <add>, %145, %cst_18 [0] : vector<32x2xf32> to vector<2xf32>
    %147 = vector.shape_cast %146 : vector<2xf32> to vector<1x2xf32>
    %148 = vector.broadcast %16 : f32 to vector<1x2xf32>
    %149 = arith.addf %147, %148 : vector<1x2xf32>
    %150 = vector.extract_strided_slice %21 {offsets = [7, 0], sizes = [1, 2], strides = [1, 1]} : vector<8x2xf32> to vector<1x2xf32>
    %151 = vector.broadcast %150 : vector<1x2xf32> to vector<32x2xf32>
    %152 = arith.mulf %151, %3 : vector<32x2xf32>
    %153 = arith.addf %15, %152 : vector<32x2xf32>
    %154 = vector.extract_strided_slice %23 {offsets = [7, 0], sizes = [1, 2], strides = [1, 1]} : vector<8x2xf32> to vector<1x2xf32>
    %155 = vector.broadcast %154 : vector<1x2xf32> to vector<32x2xf32>
    %156 = arith.mulf %155, %6 : vector<32x2xf32>
    %157 = arith.addf %153, %156 : vector<32x2xf32>
    %158 = vector.broadcast %149 : vector<1x2xf32> to vector<32x2xf32>
    %159 = arith.mulf %158, %9 : vector<32x2xf32>
    %160 = arith.addf %157, %159 : vector<32x2xf32>
    %cst_19 = arith.constant 0.000000e+00 : f32
    %161 = vector.broadcast %cst_19 : f32 to vector<32x2xf32>
    %162 = arith.maximumf %160, %161 : vector<32x2xf32>
    %163 = arith.mulf %162, %12 : vector<32x2xf32>
    %cst_20 = arith.constant dense<0.000000e+00> : vector<2xf32>
    %164 = vector.multi_reduction <add>, %163, %cst_20 [0] : vector<32x2xf32> to vector<2xf32>
    %165 = vector.shape_cast %164 : vector<2xf32> to vector<1x2xf32>
    %166 = vector.broadcast %16 : f32 to vector<1x2xf32>
    %167 = arith.addf %165, %166 : vector<1x2xf32>
    %168 = tpu.concatenate %41, %59, %77, %95, %113, %131, %149, %167 in 0 : vector<1x2xf32>, vector<1x2xf32>, vector<1x2xf32>, vector<1x2xf32>, vector<1x2xf32>, vector<1x2xf32>, vector<1x2xf32>, vector<1x2xf32> -> vector<8x2xf32>
    %169 = arith.index_cast %19 : i32 to index
    %c0_21 = arith.constant 0 : index
    %170 = vector.load %arg5[%169, %c0_21] : memref<8x2xf32, #tpu.memory_space<vmem>>, vector<8x2xf32>
    tpu.vector_store %arg5[%169, %c0_21], %168 {strides = array<i32>} : memref<8x2xf32, #tpu.memory_space<vmem>>, vector<8x2xf32>,
    %c1_i32 = arith.constant 1 : i32
    return
  }
  func.func @transform_0(%arg0: i32) -> (i32, i32) {
    %c0_i32 = arith.constant 0 : i32
    %c0_i32_0 = arith.constant 0 : i32
    return %c0_i32, %arg0 : i32, i32
  }
  func.func @transform_1(%arg0: i32) -> (i32, i32) {
    %c0_i32 = arith.constant 0 : i32
    %c0_i32_0 = arith.constant 0 : i32
    return %c0_i32, %arg0 : i32, i32
  }
  func.func @transform_2(%arg0: i32) -> (i32, i32) {
    %c0_i32 = arith.constant 0 : i32
    %c0_i32_0 = arith.constant 0 : i32
    %c0_i32_1 = arith.constant 0 : i32
    return %c0_i32, %c0_i32_0 : i32, i32
  }
  func.func @transform_3(%arg0: i32) -> (i32, i32) {
    %c0_i32 = arith.constant 0 : i32
    %c0_i32_0 = arith.constant 0 : i32
    %c0_i32_1 = arith.constant 0 : i32
    return %c0_i32, %c0_i32_0 : i32, i32
  }
  func.func @transform_4(%arg0: i32) -> (i32, i32) {
    %c0_i32 = arith.constant 0 : i32
    %c0_i32_0 = arith.constant 0 : i32
    return %c0_i32, %arg0 : i32, i32
  }
}

</mosaic_0001>

<llo_original>
// kernel: tpu_custom_call.1
$region0: #{tpu_custom_call.1}
  #allocation0 [shape = 'u32[]', space=smem, size = 0x4, offset = 0x4, fixed_abs, tag = 'smem constant byte address 0x4 - core index']
  #allocation1 [shape = 'u32[144,128]{1,0:T(1,128)}', space=vmem, size = 0x12000, scoped, tag = 'internal scratch']
  #allocation2 [shape = 'f32[1,1]{1,0:T(1,128)S(6)}', space=smem, size = 0x200, scoped, tag = 'scoped memory for tpu_custom_call.1']
  %s0 = inlined_call_operand.vmem [shape: f32[8,2], index: 0, kind: input, shape index: {}]
  %s1 = inlined_call_operand.vmem [shape: f32[8,2], index: 1, kind: input, shape index: {}]
  %s2 = inlined_call_operand.vmem [shape: f32[32,5], index: 2, kind: input, shape index: {}]
  %s3 = inlined_call_operand.<no memory space> [shape: f32[1,1], index: 3, kind: input, shape index: {}]
  %s4 = inlined_call_operand.vmem [shape: f32[8,2], index: 4, kind: output, shape index: {}]
  %s5 = sld [smem:[#allocation0]]
  $region26: #{tpu_custom_call.1} parent=0
    _
  %s7 = ssub.s32 1, %s5
  %s8 = scalar_select 0, %s7, %s5
  %9 = sst [smem:[#allocation2]] %s3
  // Predicated region
  $region2: #{tpu_custom_call.1} parent=0 // pred_check
    _
  $region3: #{tpu_custom_call.1} parent=0 // pred_check_branch
    %11 = sbr.rel (0) target = $region5
  $region4: #{tpu_custom_call.1} parent=0 // pred_region
    _
  $region5: #{tpu_custom_call.1} parent=0 // pred_fallthru
    _
  // Predicated region
  $region6: #{tpu_custom_call.1} parent=0 // pred_check
    _
  $region7: #{tpu_custom_call.1} parent=0 // pred_check_branch
    %13 = sbr.rel (0) target = $region9
  $region8: #{tpu_custom_call.1} parent=0 // pred_region
    _
  $region9: #{tpu_custom_call.1} parent=0 // pred_fallthru
    _
  // Predicated region
  $region10: #{tpu_custom_call.1} parent=0 // pred_check
    _
  $region11: #{tpu_custom_call.1} parent=0 // pred_check_branch
    %15 = sbr.rel (0) target = $region13
  $region12: #{tpu_custom_call.1} parent=0 // pred_region
    _
  $region13: #{tpu_custom_call.1} parent=0 // pred_fallthru
    _
  // Predicated region
  $region14: #{tpu_custom_call.1} parent=0 // pred_check
    _
  $region15: #{tpu_custom_call.1} parent=0 // pred_check_branch
    %17 = sbr.rel (0) target = $region17
  $region16: #{tpu_custom_call.1} parent=0 // pred_region
    _
  $region17: #{tpu_custom_call.1} parent=0 // pred_fallthru
    _
  %v18 = vld [vmem:[%s2] sm:$0xff]
  %v19 = vld [vmem:[%s2 + $0x8] sm:$0xff]
  %v20 = vld [vmem:[%s2 + $0x10] sm:$0xff]
  %v21 = vld [vmem:[%s2 + $0x18] sm:$0xff]
  %23 = vset.pattern.permute.xlu0 0
  %24 = vperm.xlu0 %23, %v18
  %v25 = vpop.permute.xlu0 %24
  %28 = vset.pattern.permute.xlu0 0
  %29 = vperm.xlu0 %28, %v19
  %v30 = vpop.permute.xlu0 %29
  %33 = vset.pattern.permute.xlu0 0
  %34 = vperm.xlu0 %33, %v20
  %v35 = vpop.permute.xlu0 %34
  %38 = vset.pattern.permute.xlu0 0
  %39 = vperm.xlu0 %38, %v21
  %v40 = vpop.permute.xlu0 %39
  %42 = vset.pattern.permute.xlu0 1
  %43 = vperm.xlu0 %42, %v18
  %v44 = vpop.permute.xlu0 %43
  %46 = vset.pattern.permute.xlu0 1
  %47 = vperm.xlu0 %46, %v19
  %v48 = vpop.permute.xlu0 %47
  %50 = vset.pattern.permute.xlu0 1
  %51 = vperm.xlu0 %50, %v20
  %v52 = vpop.permute.xlu0 %51
  %54 = vset.pattern.permute.xlu0 1
  %55 = vperm.xlu0 %54, %v21
  %v56 = vpop.permute.xlu0 %55
  %58 = vset.pattern.permute.xlu0 2
  %59 = vperm.xlu0 %58, %v18
  %v60 = vpop.permute.xlu0 %59
  %62 = vset.pattern.permute.xlu0 2
  %63 = vperm.xlu0 %62, %v19
  %v64 = vpop.permute.xlu0 %63
  %66 = vset.pattern.permute.xlu0 2
  %67 = vperm.xlu0 %66, %v20
  %v68 = vpop.permute.xlu0 %67
  %70 = vset.pattern.permute.xlu0 2
  %71 = vperm.xlu0 %70, %v21
  %v72 = vpop.permute.xlu0 %71
  %74 = vset.pattern.permute.xlu0 3
  %75 = vperm.xlu0 %74, %v18
  %v76 = vpop.permute.xlu0 %75
  %78 = vset.pattern.permute.xlu0 3
  %79 = vperm.xlu0 %78, %v19
  %v80 = vpop.permute.xlu0 %79
  %82 = vset.pattern.permute.xlu0 3
  %83 = vperm.xlu0 %82, %v20
  %v84 = vpop.permute.xlu0 %83
  %86 = vset.pattern.permute.xlu0 3
  %87 = vperm.xlu0 %86, %v21
  %v88 = vpop.permute.xlu0 %87
  %90 = vset.pattern.permute.xlu0 4
  %91 = vperm.xlu0 %90, %v18
  %v92 = vpop.permute.xlu0 %91
  %94 = vset.pattern.permute.xlu0 4
  %95 = vperm.xlu0 %94, %v19
  %v96 = vpop.permute.xlu0 %95
  %98 = vset.pattern.permute.xlu0 4
  %99 = vperm.xlu0 %98, %v20
  %v100 = vpop.permute.xlu0 %99
  %102 = vset.pattern.permute.xlu0 4
  %103 = vperm.xlu0 %102, %v21
  %v104 = vpop.permute.xlu0 %103
  %s106 = sld [smem:[#allocation2]]
  %v107 = vld [vmem:[%s0] sm:$0xff]
  %v108 = vld [vmem:[%s1] sm:$0xff]
  %v109 = vlaneseq
  %v110 = vshrl.u32 %v109, 7
  %v111 = vsub.s32 0, %v110
  %v112 = vrot.slane %v107, %v111
  %v113 = vmul.f32 %v112, %v25
  %v114 = vmul.f32 %v112, %v30
  %v115 = vmul.f32 %v112, %v35
  %v116 = vmul.f32 %v112, %v40
  %v117 = vadd.f32 %v92, %v113
  %v118 = vadd.f32 %v96, %v114
  %v119 = vadd.f32 %v100, %v115
  %v120 = vadd.f32 %v104, %v116
  %v121 = vlaneseq
  %v122 = vshrl.u32 %v121, 7
  %v123 = vsub.s32 0, %v122
  %v124 = vrot.slane %v108, %v123
  %v125 = vmul.f32 %v124, %v44
  %v126 = vmul.f32 %v124, %v48
  %v127 = vmul.f32 %v124, %v52
  %v128 = vmul.f32 %v124, %v56
  %v129 = vadd.f32 %v117, %v125
  %v130 = vadd.f32 %v118, %v126
  %v131 = vadd.f32 %v119, %v127
  %v132 = vadd.f32 %v120, %v128
  %v133 = vmul.f32 %v60, 0.0
  %v134 = vmul.f32 %v64, 0.0
  %v135 = vmul.f32 %v68, 0.0
  %v136 = vmul.f32 %v72, 0.0
  %v137 = vadd.f32 %v129, %v133
  %v138 = vadd.f32 %v130, %v134
  %v139 = vadd.f32 %v131, %v135
  %v140 = vadd.f32 %v132, %v136
  %v141 = vmax.f32 %v137, 0.0
  %v142 = vmax.f32 %v138, 0.0
  %v143 = vmax.f32 %v139, 0.0
  %v144 = vmax.f32 %v140, 0.0
  %v145 = vmul.f32 %v141, %v76
  %v146 = vmul.f32 %v142, %v80
  %v147 = vmul.f32 %v143, %v84
  %v148 = vmul.f32 %v144, %v88
  %vm149 = vcmask 15360
  %v150 = vsel %vm149, %v145, 0.0
  %v151 = vsel %vm149, %v146, 0.0
  %v152 = vadd.f32 %v150, %v151
  %v153 = vsel %vm149, %v147, 0.0
  %v154 = vadd.f32 %v152, %v153
  %v155 = vsel %vm149, %v148, 0.0
  %v156 = vadd.f32 %v154, %v155
  %v157 = vrot.slane %v156, 4
  %v158 = vadd.f32 %v156, %v157
  %v159 = vrot.slane %v158, 2
  %v160 = vadd.f32 %v158, %v159
  %v161 = vrot.slane %v160, 1
  %v162 = vadd.f32 %v160, %v161
  %v163 = vstv %s106
  %v164 = vadd.f32 %v162, %v163
  %v165 = vlaneseq
  %v166 = vshrl.u32 %v165, 7
  %v167 = vsub.s32 1, %v166
  %v168 = vrot.slane %v107, %v167
  %v169 = vmul.f32 %v168, %v25
  %v170 = vmul.f32 %v168, %v30
  %v171 = vmul.f32 %v168, %v35
  %v172 = vmul.f32 %v168, %v40
  %v173 = vadd.f32 %v92, %v169
  %v174 = vadd.f32 %v96, %v170
  %v175 = vadd.f32 %v100, %v171
  %v176 = vadd.f32 %v104, %v172
  %v177 = vlaneseq
  %v178 = vshrl.u32 %v177, 7
  %v179 = vsub.s32 1, %v178
  %v180 = vrot.slane %v108, %v179
  %v181 = vmul.f32 %v180, %v44
  %v182 = vmul.f32 %v180, %v48
  %v183 = vmul.f32 %v180, %v52
  %v184 = vmul.f32 %v180, %v56
  %v185 = vadd.f32 %v173, %v181
  %v186 = vadd.f32 %v174, %v182
  %v187 = vadd.f32 %v175, %v183
  %v188 = vadd.f32 %v176, %v184
  %v189 = vmul.f32 %v164, %v60
  %v190 = vmul.f32 %v164, %v64
  %v191 = vmul.f32 %v164, %v68
  %v192 = vmul.f32 %v164, %v72
  %v193 = vadd.f32 %v185, %v189
  %v194 = vadd.f32 %v186, %v190
  %v195 = vadd.f32 %v187, %v191
  %v196 = vadd.f32 %v188, %v192
  %v197 = vmax.f32 %v193, 0.0
  %v198 = vmax.f32 %v194, 0.0
  %v199 = vmax.f32 %v195, 0.0
  %v200 = vmax.f32 %v196, 0.0
  %v201 = vmul.f32 %v197, %v76
  %v202 = vmul.f32 %v198, %v80
  %v203 = vmul.f32 %v199, %v84
  %v204 = vmul.f32 %v200, %v88
  %v205 = vsel %vm149, %v201, 0.0
  %v206 = vsel %vm149, %v202, 0.0
  %v207 = vadd.f32 %v205, %v206
  %v208 = vsel %vm149, %v203, 0.0
  %v209 = vadd.f32 %v207, %v208
  %v210 = vsel %vm149, %v204, 0.0
  %v211 = vadd.f32 %v209, %v210
  %v212 = vrot.slane %v211, 4
  %v213 = vadd.f32 %v211, %v212
  %v214 = vrot.slane %v213, 2
  %v215 = vadd.f32 %v213, %v214
  %v216 = vrot.slane %v215, 1
  %v217 = vadd.f32 %v215, %v216
  %v218 = vadd.f32 %v217, %v163
  %v219 = vlaneseq
  %v220 = vshrl.u32 %v219, 7
  %v221 = vsub.s32 2, %v220
  %v222 = vrot.slane %v107, %v221
  %v223 = vmul.f32 %v222, %v25
  %v224 = vmul.f32 %v222, %v30
  %v225 = vmul.f32 %v222, %v35
  %v226 = vmul.f32 %v222, %v40
  %v227 = vadd.f32 %v92, %v223
  %v228 = vadd.f32 %v96, %v224
  %v229 = vadd.f32 %v100, %v225
  %v230 = vadd.f32 %v104, %v226
  %v231 = vlaneseq
  %v232 = vshrl.u32 %v231, 7
  %v233 = vsub.s32 2, %v232
  %v234 = vrot.slane %v108, %v233
  %v235 = vmul.f32 %v234, %v44
  %v236 = vmul.f32 %v234, %v48
  %v237 = vmul.f32 %v234, %v52
  %v238 = vmul.f32 %v234, %v56
  %v239 = vadd.f32 %v227, %v235
  %v240 = vadd.f32 %v228, %v236
  %v241 = vadd.f32 %v229, %v237
  %v242 = vadd.f32 %v230, %v238
  %v243 = vmul.f32 %v218, %v60
  %v244 = vmul.f32 %v218, %v64
  %v245 = vmul.f32 %v218, %v68
  %v246 = vmul.f32 %v218, %v72
  %v247 = vadd.f32 %v239, %v243
  %v248 = vadd.f32 %v240, %v244
  %v249 = vadd.f32 %v241, %v245
  %v250 = vadd.f32 %v242, %v246
  %v251 = vmax.f32 %v247, 0.0
  %v252 = vmax.f32 %v248, 0.0
  %v253 = vmax.f32 %v249, 0.0
  %v254 = vmax.f32 %v250, 0.0
  %v255 = vmul.f32 %v251, %v76
  %v256 = vmul.f32 %v252, %v80
  %v257 = vmul.f32 %v253, %v84
  %v258 = vmul.f32 %v254, %v88
  %v259 = vsel %vm149, %v255, 0.0
  %v260 = vsel %vm149, %v256, 0.0
  %v261 = vadd.f32 %v259, %v260
  %v262 = vsel %vm149, %v257, 0.0
  %v263 = vadd.f32 %v261, %v262
  %v264 = vsel %vm149, %v258, 0.0
  %v265 = vadd.f32 %v263, %v264
  %v266 = vrot.slane %v265, 4
  %v267 = vadd.f32 %v265, %v266
  %v268 = vrot.slane %v267, 2
  %v269 = vadd.f32 %v267, %v268
  %v270 = vrot.slane %v269, 1
  %v271 = vadd.f32 %v269, %v270
  %v272 = vadd.f32 %v271, %v163
  %v273 = vlaneseq
  %v274 = vshrl.u32 %v273, 7
  %v275 = vsub.s32 3, %v274
  %v276 = vrot.slane %v107, %v275
  %v277 = vmul.f32 %v276, %v25
  %v278 = vmul.f32 %v276, %v30
  %v279 = vmul.f32 %v276, %v35
  %v280 = vmul.f32 %v276, %v40
  %v281 = vadd.f32 %v92, %v277
  %v282 = vadd.f32 %v96, %v278
  %v283 = vadd.f32 %v100, %v279
  %v284 = vadd.f32 %v104, %v280
  %v285 = vlaneseq
  %v286 = vshrl.u32 %v285, 7
  %v287 = vsub.s32 3, %v286
  %v288 = vrot.slane %v108, %v287
  %v289 = vmul.f32 %v288, %v44
  %v290 = vmul.f32 %v288, %v48
  %v291 = vmul.f32 %v288, %v52
  %v292 = vmul.f32 %v288, %v56
  %v293 = vadd.f32 %v281, %v289
  %v294 = vadd.f32 %v282, %v290
  %v295 = vadd.f32 %v283, %v291
  %v296 = vadd.f32 %v284, %v292
  %v297 = vmul.f32 %v272, %v60
  %v298 = vmul.f32 %v272, %v64
  %v299 = vmul.f32 %v272, %v68
  %v300 = vmul.f32 %v272, %v72
  %v301 = vadd.f32 %v293, %v297
  %v302 = vadd.f32 %v294, %v298
  %v303 = vadd.f32 %v295, %v299
  %v304 = vadd.f32 %v296, %v300
  %v305 = vmax.f32 %v301, 0.0
  %v306 = vmax.f32 %v302, 0.0
  %v307 = vmax.f32 %v303, 0.0
  %v308 = vmax.f32 %v304, 0.0
  %v309 = vmul.f32 %v305, %v76
  %v310 = vmul.f32 %v306, %v80
  %v311 = vmul.f32 %v307, %v84
  %v312 = vmul.f32 %v308, %v88
  %v313 = vsel %vm149, %v309, 0.0
  %v314 = vsel %vm149, %v310, 0.0
  %v315 = vadd.f32 %v313, %v314
  %v316 = vsel %vm149, %v311, 0.0
  %v317 = vadd.f32 %v315, %v316
  %v318 = vsel %vm149, %v312, 0.0
  %v319 = vadd.f32 %v317, %v318
  %v320 = vrot.slane %v319, 4
  %v321 = vadd.f32 %v319, %v320
  %v322 = vrot.slane %v321, 2
  %v323 = vadd.f32 %v321, %v322
  %v324 = vrot.slane %v323, 1
  %v325 = vadd.f32 %v323, %v324
  %v326 = vadd.f32 %v325, %v163
  %v327 = vlaneseq
  %v328 = vshrl.u32 %v327, 7
  %v329 = vsub.s32 4, %v328
  %v330 = vrot.slane %v107, %v329
  %v331 = vmul.f32 %v330, %v25
  %v332 = vmul.f32 %v330, %v30
  %v333 = vmul.f32 %v330, %v35
  %v334 = vmul.f32 %v330, %v40
  %v335 = vadd.f32 %v92, %v331
  %v336 = vadd.f32 %v96, %v332
  %v337 = vadd.f32 %v100, %v333
  %v338 = vadd.f32 %v104, %v334
  %v339 = vlaneseq
  %v340 = vshrl.u32 %v339, 7
  %v341 = vsub.s32 4, %v340
  %v342 = vrot.slane %v108, %v341
  %v343 = vmul.f32 %v342, %v44
  %v344 = vmul.f32 %v342, %v48
  %v345 = vmul.f32 %v342, %v52
  %v346 = vmul.f32 %v342, %v56
  %v347 = vadd.f32 %v335, %v343
  %v348 = vadd.f32 %v336, %v344
  %v349 = vadd.f32 %v337, %v345
  %v350 = vadd.f32 %v338, %v346
  %v351 = vmul.f32 %v326, %v60
  %v352 = vmul.f32 %v326, %v64
  %v353 = vmul.f32 %v326, %v68
  %v354 = vmul.f32 %v326, %v72
  %v355 = vadd.f32 %v347, %v351
  %v356 = vadd.f32 %v348, %v352
  %v357 = vadd.f32 %v349, %v353
  %v358 = vadd.f32 %v350, %v354
  %v359 = vmax.f32 %v355, 0.0
  %v360 = vmax.f32 %v356, 0.0
  %v361 = vmax.f32 %v357, 0.0
  %v362 = vmax.f32 %v358, 0.0
  %v363 = vmul.f32 %v359, %v76
  %v364 = vmul.f32 %v360, %v80
  %v365 = vmul.f32 %v361, %v84
  %v366 = vmul.f32 %v362, %v88
  %v367 = vsel %vm149, %v363, 0.0
  %v368 = vsel %vm149, %v364, 0.0
  %v369 = vadd.f32 %v367, %v368
  %v370 = vsel %vm149, %v365, 0.0
  %v371 = vadd.f32 %v369, %v370
  %v372 = vsel %vm149, %v366, 0.0
  %v373 = vadd.f32 %v371, %v372
  %v374 = vrot.slane %v373, 4
  %v375 = vadd.f32 %v373, %v374
  %v376 = vrot.slane %v375, 2
  %v377 = vadd.f32 %v375, %v376
  %v378 = vrot.slane %v377, 1
  %v379 = vadd.f32 %v377, %v378
  %v380 = vadd.f32 %v379, %v163
  %v381 = vlaneseq
  %v382 = vshrl.u32 %v381, 7
  %v383 = vsub.s32 5, %v382
  %v384 = vrot.slane %v107, %v383
  %v385 = vmul.f32 %v384, %v25
  %v386 = vmul.f32 %v384, %v30
  %v387 = vmul.f32 %v384, %v35
  %v388 = vmul.f32 %v384, %v40
  %v389 = vadd.f32 %v92, %v385
  %v390 = vadd.f32 %v96, %v386
  %v391 = vadd.f32 %v100, %v387
  %v392 = vadd.f32 %v104, %v388
  %v393 = vlaneseq
  %v394 = vshrl.u32 %v393, 7
  %v395 = vsub.s32 5, %v394
  %v396 = vrot.slane %v108, %v395
  %v397 = vmul.f32 %v396, %v44
  %v398 = vmul.f32 %v396, %v48
  %v399 = vmul.f32 %v396, %v52
  %v400 = vmul.f32 %v396, %v56
  %v401 = vadd.f32 %v389, %v397
  %v402 = vadd.f32 %v390, %v398
  %v403 = vadd.f32 %v391, %v399
  %v404 = vadd.f32 %v392, %v400
  %v405 = vmul.f32 %v380, %v60
  %v406 = vmul.f32 %v380, %v64
  %v407 = vmul.f32 %v380, %v68
  %v408 = vmul.f32 %v380, %v72
  %v409 = vadd.f32 %v401, %v405
  %v410 = vadd.f32 %v402, %v406
  %v411 = vadd.f32 %v403, %v407
  %v412 = vadd.f32 %v404, %v408
  %v413 = vmax.f32 %v409, 0.0
  %v414 = vmax.f32 %v410, 0.0
  %v415 = vmax.f32 %v411, 0.0
  %v416 = vmax.f32 %v412, 0.0
  %v417 = vmul.f32 %v413, %v76
  %v418 = vmul.f32 %v414, %v80
  %v419 = vmul.f32 %v415, %v84
  %v420 = vmul.f32 %v416, %v88
  %v421 = vsel %vm149, %v417, 0.0
  %v422 = vsel %vm149, %v418, 0.0
  %v423 = vadd.f32 %v421, %v422
  %v424 = vsel %vm149, %v419, 0.0
  %v425 = vadd.f32 %v423, %v424
  %v426 = vsel %vm149, %v420, 0.0
  %v427 = vadd.f32 %v425, %v426
  %v428 = vrot.slane %v427, 4
  %v429 = vadd.f32 %v427, %v428
  %v430 = vrot.slane %v429, 2
  %v431 = vadd.f32 %v429, %v430
  %v432 = vrot.slane %v431, 1
  %v433 = vadd.f32 %v431, %v432
  %v434 = vadd.f32 %v433, %v163
  %v435 = vlaneseq
  %v436 = vshrl.u32 %v435, 7
  %v437 = vsub.s32 6, %v436
  %v438 = vrot.slane %v107, %v437
  %v439 = vmul.f32 %v438, %v25
  %v440 = vmul.f32 %v438, %v30
  %v441 = vmul.f32 %v438, %v35
  %v442 = vmul.f32 %v438, %v40
  %v443 = vadd.f32 %v92, %v439
  %v444 = vadd.f32 %v96, %v440
  %v445 = vadd.f32 %v100, %v441
  %v446 = vadd.f32 %v104, %v442
  %v447 = vlaneseq
  %v448 = vshrl.u32 %v447, 7
  %v449 = vsub.s32 6, %v448
  %v450 = vrot.slane %v108, %v449
  %v451 = vmul.f32 %v450, %v44
  %v452 = vmul.f32 %v450, %v48
  %v453 = vmul.f32 %v450, %v52
  %v454 = vmul.f32 %v450, %v56
  %v455 = vadd.f32 %v443, %v451
  %v456 = vadd.f32 %v444, %v452
  %v457 = vadd.f32 %v445, %v453
  %v458 = vadd.f32 %v446, %v454
  %v459 = vmul.f32 %v434, %v60
  %v460 = vmul.f32 %v434, %v64
  %v461 = vmul.f32 %v434, %v68
  %v462 = vmul.f32 %v434, %v72
  %v463 = vadd.f32 %v455, %v459
  %v464 = vadd.f32 %v456, %v460
  %v465 = vadd.f32 %v457, %v461
  %v466 = vadd.f32 %v458, %v462
  %v467 = vmax.f32 %v463, 0.0
  %v468 = vmax.f32 %v464, 0.0
  %v469 = vmax.f32 %v465, 0.0
  %v470 = vmax.f32 %v466, 0.0
  %v471 = vmul.f32 %v467, %v76
  %v472 = vmul.f32 %v468, %v80
  %v473 = vmul.f32 %v469, %v84
  %v474 = vmul.f32 %v470, %v88
  %v475 = vsel %vm149, %v471, 0.0
  %v476 = vsel %vm149, %v472, 0.0
  %v477 = vadd.f32 %v475, %v476
  %v478 = vsel %vm149, %v473, 0.0
  %v479 = vadd.f32 %v477, %v478
  %v480 = vsel %vm149, %v474, 0.0
  %v481 = vadd.f32 %v479, %v480
  %v482 = vrot.slane %v481, 4
  %v483 = vadd.f32 %v481, %v482
  %v484 = vrot.slane %v483, 2
  %v485 = vadd.f32 %v483, %v484
  %v486 = vrot.slane %v485, 1
  %v487 = vadd.f32 %v485, %v486
  %v488 = vadd.f32 %v487, %v163
  %v489 = vlaneseq
  %v490 = vshrl.u32 %v489, 7
  %v491 = vsub.s32 7, %v490
  %v492 = vrot.slane %v107, %v491
  %v493 = vmul.f32 %v492, %v25
  %v494 = vmul.f32 %v492, %v30
  %v495 = vmul.f32 %v492, %v35
  %v496 = vmul.f32 %v492, %v40
  %v497 = vadd.f32 %v92, %v493
  %v498 = vadd.f32 %v96, %v494
  %v499 = vadd.f32 %v100, %v495
  %v500 = vadd.f32 %v104, %v496
  %v501 = vlaneseq
  %v502 = vshrl.u32 %v501, 7
  %v503 = vsub.s32 7, %v502
  %v504 = vrot.slane %v108, %v503
  %v505 = vmul.f32 %v504, %v44
  %v506 = vmul.f32 %v504, %v48
  %v507 = vmul.f32 %v504, %v52
  %v508 = vmul.f32 %v504, %v56
  %v509 = vadd.f32 %v497, %v505
  %v510 = vadd.f32 %v498, %v506
  %v511 = vadd.f32 %v499, %v507
  %v512 = vadd.f32 %v500, %v508
  %v513 = vmul.f32 %v488, %v60
  %v514 = vmul.f32 %v488, %v64
  %v515 = vmul.f32 %v488, %v68
  %v516 = vmul.f32 %v488, %v72
  %v517 = vadd.f32 %v509, %v513
  %v518 = vadd.f32 %v510, %v514
  %v519 = vadd.f32 %v511, %v515
  %v520 = vadd.f32 %v512, %v516
  %v521 = vmax.f32 %v517, 0.0
  %v522 = vmax.f32 %v518, 0.0
  %v523 = vmax.f32 %v519, 0.0
  %v524 = vmax.f32 %v520, 0.0
  %v525 = vmul.f32 %v521, %v76
  %v526 = vmul.f32 %v522, %v80
  %v527 = vmul.f32 %v523, %v84
  %v528 = vmul.f32 %v524, %v88
  %v529 = vsel %vm149, %v525, 0.0
  %v530 = vsel %vm149, %v526, 0.0
  %v531 = vadd.f32 %v529, %v530
  %v532 = vsel %vm149, %v527, 0.0
  %v533 = vadd.f32 %v531, %v532
  %v534 = vsel %vm149, %v528, 0.0
  %v535 = vadd.f32 %v533, %v534
  %v536 = vrot.slane %v535, 4
  %v537 = vadd.f32 %v535, %v536
  %v538 = vrot.slane %v537, 2
  %v539 = vadd.f32 %v537, %v538
  %v540 = vrot.slane %v539, 1
  %v541 = vadd.f32 %v539, %v540
  %v542 = vadd.f32 %v541, %v163
  %vm543 = vcmask 1040384
  %v544 = vsel %vm543, %v164, %v218
  %vm545 = vcmask 1041408
  %v546 = vsel %vm545, %v544, %v272
  %vm547 = vcmask 1042432
  %v548 = vsel %vm547, %v546, %v326
  %vm549 = vcmask 1043456
  %v550 = vsel %vm549, %v548, %v380
  %vm551 = vcmask 1044480
  %v552 = vsel %vm551, %v550, %v434
  %vm553 = vcmask 1045504
  %v554 = vsel %vm553, %v552, %v488
  %vm555 = vcmask 1046528
  %v556 = vsel %vm555, %v554, %v542
  %557 = vst.msk [vmem:[%s4] sm:$0xff] %vm149, %v556
  // Predicated region
  $region18: #{tpu_custom_call.1} parent=0 // pred_check
    _
  $region19: #{tpu_custom_call.1} parent=0 // pred_check_branch
    %559 = sbr.rel (0) target = $region21
  $region20: #{tpu_custom_call.1} parent=0 // pred_region
    _
  $region21: #{tpu_custom_call.1} parent=0 // pred_fallthru
    _
  // Predicated region
  $region22: #{tpu_custom_call.1} parent=0 // pred_check
    _
  $region23: #{tpu_custom_call.1} parent=0 // pred_check_branch
    %561 = sbr.rel (0) target = $region25
  $region24: #{tpu_custom_call.1} parent=0 // pred_region
    _
  $region25: #{tpu_custom_call.1} parent=0 // pred_fallthru
    _

</llo_original>
